<compile_context>
chip_gen: v7x
topology: tpu7x:2x2x1
jax: 0.10.0
libtpu: 0.0.40
codegen_flags: <defaults>
</compile_context>

<pallas_src>
import math
from typing import Any, Dict

import jax
import jax.numpy as jnp
from jax.experimental import pallas as pl
from jax.experimental.pallas import tpu as pltpu


# ---------------------------------------------------------------------------
# Pallas kernel: identity copy of one (TM, TN) VMEM tile.
# ---------------------------------------------------------------------------
def _identity_kernel(x_ref, o_ref):
    o_ref[...] = x_ref[...]


def _round_up(x: int, m: int) -> int:
    return ((x + m - 1) // m) * m


def _identity_pallas_2d(x2d: jnp.ndarray, tm: int, tn: int) -> jnp.ndarray:
    """Tiled identity over a 2-D array whose dims are multiples of (tm, tn)."""
    M, N = x2d.shape
    return pl.pallas_call(
        _identity_kernel,
        out_shape=jax.ShapeDtypeStruct((M, N), x2d.dtype),
        grid_spec=pltpu.PrefetchScalarGridSpec(
            num_scalar_prefetch=0,
            grid=(M // tm, N // tn),
            in_specs=[pl.BlockSpec((tm, tn), lambda i, j: (i, j))],
            out_specs=pl.BlockSpec((tm, tn), lambda i, j: (i, j)),
        ),
        compiler_params=pltpu.CompilerParams(
            # Both axes independent -> shards across v7x's 2 TensorCores.
            dimension_semantics=("parallel", "parallel"),
            # Explicit scoped-VMEM budget, safe on v5e/v6e (128 MiB) and
            # v7x (64 MiB).  Tiles are sized so 4 * tile_bytes << this.
            vmem_limit_bytes=32 * 1024 * 1024,
        ),
    )(x2d)


def _choose_layout(total_elems: int, itemsize: int):
    """Pick a lane-dense (rows, LANE) view and (tm, tn) tile sizes.

    Returns (lane, padded_rows, tm, tn) such that:
      * lane is a multiple of 128 (lane-dense, unmasked full-width stores),
      * padded_rows is a multiple of tm,
      * tm is a multiple of the dtype's packed sublane minimum,
      * tile bytes <= ~2 MiB so double-buffered in+out (~8 MiB) fits the
        scoped VMEM budget on every TPU generation (incl. v7x's 64 MiB).
    """
    # Packed-tile sublane minimum: 8 for f32, 16 for bf16, 32 for int8/fp8.
    sublane = max(8, 32 // max(1, itemsize))

    lane = 128
    for cand in (4096, 2048, 1024, 512, 256, 128):
        if total_elems >= cand * sublane:
            lane = cand
            break

    rows = -(-total_elems // lane)              # cdiv
    padded_rows = _round_up(rows, sublane)

    max_block_bytes = 2 * 1024 * 1024           # 2 MiB per tile
    tn = lane
    tm_cap = max(sublane, max_block_bytes // (tn * itemsize))
    tm_cap = max(sublane, (tm_cap // sublane) * sublane)
    tm = min(padded_rows, tm_cap)
    padded_rows = _round_up(padded_rows, tm)
    return lane, padded_rows, tm, tn


def _passthrough_impl(x: jnp.ndarray) -> jnp.ndarray:
    """Identity pass-through via a lane-dense tiled Pallas copy."""
    orig_shape = x.shape
    total = int(math.prod(orig_shape))
    if total == 0:
        return x  # nothing to copy
    itemsize = jnp.dtype(x.dtype).itemsize

    lane, padded_rows, tm, tn = _choose_layout(total, itemsize)
    padded_total = padded_rows * lane

    flat = x.reshape(-1)
    if padded_total != total:
        # Pad only the ragged tail (zero padding for nicely-sized inputs).
        flat = jnp.pad(flat, (0, padded_total - total))

    out2d = _identity_pallas_2d(flat.reshape(padded_rows, lane), tm, tn)

    out = out2d.reshape(-1)
    if padded_total != total:
        out = out[:total]
    return out.reshape(orig_shape)


# Single XLA dispatch for the whole reshape / (tail-pad) / kernel / crop path.
_passthrough_jit = jax.jit(_passthrough_impl)


# ---------------------------------------------------------------------------
# JAX-side BaseModel mirror.
# ---------------------------------------------------------------------------
class ModelConfig:
    def __init__(self, input_key: str):
        self.input_key = input_key


class BaseModelPallas:
    """JAX/Pallas mirror of the PyTorch BaseModel (no parameters)."""

    def __init__(self, config: ModelConfig):
        self.config = config
        self.input_key = config.input_key

    def forward(self, batch: Dict[str, Any], *args, **kwargs):
        # Faithful to the base class: forward itself is abstract.
        raise NotImplementedError("forward method is not implemented")

    # Concrete hot-path hook subclasses would build on: fetch the configured
    # input tensor and run it through the (identity) Pallas data path.
    def run_input_passthrough(self, batch: Dict[str, Any]) -> jnp.ndarray:
        return _passthrough_jit(batch[self.input_key])

    def compute_metrics(self, batch: Dict[str, Any], *args, **kwargs):
        return {}

    def sample(self, batch: Dict[str, Any], *args, **kwargs):
        return {}

    def log_samples(self, batch: Dict[str, Any], *args, **kwargs):
        return None

    def on_train_batch_end(self, batch: Dict[str, Any], *args, **kwargs):
        pass

    def freeze(self):
        # TODO(synk): no trainable parameters at the base-class level; nothing to freeze.
        pass


if __name__ == "__main__":
    key = jax.random.PRNGKey(0)
    x = jax.random.normal(key, (2, 4, 16, 16), dtype=jnp.float32)  # NCHW
    batch = {"image": x}

    model = BaseModelPallas(ModelConfig(input_key="image"))

    # forward() must stay abstract, exactly like the PyTorch base class.
    try:
        model.forward(batch)
        raise AssertionError("forward should have raised NotImplementedError")
    except NotImplementedError:
        pass

    out = model.run_input_passthrough(batch)
    out = jax.block_until_ready(out)

    assert out.shape == x.shape and out.dtype == x.dtype
    assert bool(jnp.allclose(out, x))
    assert model.compute_metrics(batch) == {}
    assert model.sample(batch) == {}
    assert model.log_samples(batch) is None
    model.on_train_batch_end(batch)
    model.freeze()

    print("KERNEL_OK")
</pallas_src>

<mosaic_0001>
module attributes {stable_mosaic.version = 11 : i64} {
  func.func @_identity_kernel(%arg0: i32, %arg1: i32, %arg2: memref<8x256xf32, #tpu.memory_space<vmem>>, %arg3: memref<8x256xf32, #tpu.memory_space<vmem>>) attributes {dimension_semantics = [#tpu.dimension_semantics<parallel>, #tpu.dimension_semantics<parallel>], iteration_bounds = array<i64: 1, 1>, scalar_prefetch = 0 : i64, scratch_operands = 0 : i64, tpu.core_type = #tpu.core_type<tc>, window_params = [{transform_indices = @transform_0, window_bounds = array<i64: 8, 256>}, {transform_indices = @transform_1, window_bounds = array<i64: 8, 256>}]} {
    %c0 = arith.constant 0 : index
    %c0_0 = arith.constant 0 : index
    %0 = vector.load %arg2[%c0, %c0_0] : memref<8x256xf32, #tpu.memory_space<vmem>>, vector<8x256xf32>
    %c0_1 = arith.constant 0 : index
    %c0_2 = arith.constant 0 : index
    %1 = vector.load %arg3[%c0_1, %c0_2] : memref<8x256xf32, #tpu.memory_space<vmem>>, vector<8x256xf32>
    tpu.vector_store %arg3[%c0_1, %c0_2], %0 {strides = array<i32>} : memref<8x256xf32, #tpu.memory_space<vmem>>, vector<8x256xf32>,
    return
  }
  func.func @transform_0(%arg0: i32, %arg1: i32) -> (i32, i32) {
    %c0_i32 = arith.constant 0 : i32
    return %arg0, %arg1 : i32, i32
  }
  func.func @transform_1(%arg0: i32, %arg1: i32) -> (i32, i32) {
    %c0_i32 = arith.constant 0 : i32
    return %arg0, %arg1 : i32, i32
  }
}

</mosaic_0001>

<llo_original>
// kernel: _passthrough_impl.1
$region0: #{_passthrough_impl.1}
  #allocation0 [shape = 'u32[]', space=smem, size = 0x4, offset = 0x4, fixed_abs, tag = 'smem constant byte address 0x4 - core index']
  #allocation1 [shape = 'u32[144,128]{1,0:T(1,128)}', space=vmem, size = 0x12000, scoped, tag = 'internal scratch']
  %s0 = inlined_call_operand.vmem [shape: f32[8,256], index: 0, kind: input, shape index: {}]
  %s1 = inlined_call_operand.vmem [shape: f32[8,256], index: 1, kind: output, shape index: {}]
  %s2 = sld [smem:[#allocation0]]
  $region14: #{_passthrough_impl.1} parent=0
    _
  %s4 = ssub.s32 1, %s2
  %s5 = scalar_select 0, %s4, %s2
  // Predicated region
  $region2: #{_passthrough_impl.1} parent=0 // pred_check
    _
  $region3: #{_passthrough_impl.1} parent=0 // pred_check_branch
    %7 = sbr.rel (0) target = $region5
  $region4: #{_passthrough_impl.1} parent=0 // pred_region
    _
  $region5: #{_passthrough_impl.1} parent=0 // pred_fallthru
    _
  %v8 = vld [vmem:[%s0] sm:$0xff]
  %v9 = vld [vmem:[%s0 + $0x8] sm:$0xff]
  %10 = vst [vmem:[%s1] sm:$0xff] %v8
  %11 = vst [vmem:[%s1 + $0x8] sm:$0xff] %v9
  // Predicated region
  $region6: #{_passthrough_impl.1} parent=0 // pred_check
    _
  $region7: #{_passthrough_impl.1} parent=0 // pred_check_branch
    %13 = sbr.rel (0) target = $region9
  $region8: #{_passthrough_impl.1} parent=0 // pred_region
    _
  $region9: #{_passthrough_impl.1} parent=0 // pred_fallthru
    _
  // Predicated region
  $region10: #{_passthrough_impl.1} parent=0 // pred_check
    _
  $region11: #{_passthrough_impl.1} parent=0 // pred_check_branch
    %15 = sbr.rel (0) target = $region13
  $region12: #{_passthrough_impl.1} parent=0 // pred_region
    _
  $region13: #{_passthrough_impl.1} parent=0 // pred_fallthru
    _

</llo_original>
